<compile_context>
chip_gen: v5e
topology: v5e:2x2
jax: 0.10.0
libtpu: 0.0.40
codegen_flags: <defaults>
</compile_context>

<pallas_src>
import jax
import jax.numpy as jnp
from jax.experimental import pallas as pl
from jax.experimental.pallas import tpu as pltpu


def mlp_kernel(x_ref, w1_ref, b1_ref, w2_ref, b2_ref, w3_ref, b3_ref, o_ref):
    # x_ref: (F, TB) bf16, batch on lanes. Weights: PyTorch (out, in) layout, bf16.
    x_t = x_ref[...]                                                     # (F, TB)

    h1 = jnp.dot(w1_ref[...], x_t, preferred_element_type=jnp.float32)
    h1 = jnp.maximum(h1 + b1_ref[...], 0.0)                              # (64, TB) f32

    h2 = jnp.dot(w2_ref[...], h1.astype(w2_ref.dtype),
                 preferred_element_type=jnp.float32)
    h2 = jnp.maximum(h2 + b2_ref[...], 0.0)                              # (32, TB) f32

    logits = jnp.dot(w3_ref[...], h2.astype(w3_ref.dtype),
                     preferred_element_type=jnp.float32) + b3_ref[0, 0]  # (1, TB)

    # Sigmoid: exp and reciprocal both go to the EUP slot (otherwise idle here).
    o_ref[...] = pl.reciprocal(1.0 + jnp.exp(-logits), approx=True).astype(o_ref.dtype)


def _round_up(x, m):
    return ((x + m - 1) // m) * m


def simple_nn_forward(x, params, *, tile_b=512, matmul_dtype=jnp.bfloat16):
    """x: (B, input_size) f32. params: PyTorch layout w:(out,in), b:(out,1)."""
    assert tile_b % 128 == 0, "tile_b must be a multiple of the 128-wide lane axis"
    w1, b1, w2, b2, w3, b3 = params
    B, F = x.shape

    # Feature-major so batch is on the lane axis; bf16 halves x HBM traffic.
    x_t = x.T.astype(matmul_dtype)                          # (F, B)

    # Always pad batch to a multiple of 128 -> lane-dense (unmasked) stores.
    b_pad = _round_up(B, 128)
    if b_pad > tile_b:
        tb = tile_b
        b_pad = _round_up(b_pad, tile_b)
    else:
        tb = b_pad                                          # single tile
    if b_pad != B:
        x_t = jnp.pad(x_t, ((0, 0), (0, b_pad - B)))
    grid = (b_pad // tb,)

    w1c, w2c, w3c = (w.astype(matmul_dtype) for w in (w1, w2, w3))
    b1c, b2c = b1.astype(jnp.float32), b2.astype(jnp.float32)
    b3c = b3.astype(jnp.float32)                            # (1, 1) scalar -> SMEM

    const = lambda shape: pl.BlockSpec(shape, lambda i: (0,) * len(shape))

    flops = 2 * b_pad * (F * 64 + 64 * 32 + 32 * 1)
    bytes_accessed = (x_t.size * 2 + b_pad * 4
                      + (w1c.size + w2c.size + w3c.size) * 2
                      + (b1c.size + b2c.size + b3c.size) * 4)

    out_t = pl.pallas_call(
        mlp_kernel,
        out_shape=jax.ShapeDtypeStruct((1, b_pad), jnp.float32),
        grid=grid,
        in_specs=[
            pl.BlockSpec((F, tb), lambda i: (0, i)),        # x streamed over batch
            const(w1c.shape), const(b1c.shape),             # weights/biases resident
            const(w2c.shape), const(b2c.shape),
            const(w3c.shape),
            pl.BlockSpec(memory_space=pltpu.MemorySpace.SMEM),  # b3 scalar in SMEM
        ],
        out_specs=pl.BlockSpec((1, tb), lambda i: (0, i)),  # lane-dense output
        compiler_params=pltpu.CompilerParams(
            dimension_semantics=("parallel",)),             # megacore on v7x
        cost_estimate=pl.CostEstimate(flops=flops, transcendentals=b_pad,
                                      bytes_accessed=bytes_accessed),
    )(x_t, w1c, b1c, w2c, b2c, w3c, b3c)

    return out_t[0, :B].reshape(B, 1)


def init_params(key, input_size):
    # Mimics nn.Linear's U(-1/sqrt(fan_in), 1/sqrt(fan_in)), PyTorch (out, in) layout.
    def linear(key, fan_in, fan_out):
        kw, kb = jax.random.split(key)
        bound = 1.0 / float(jnp.sqrt(jnp.float32(fan_in)))
        w = jax.random.uniform(kw, (fan_out, fan_in), jnp.float32, -bound, bound)
        b = jax.random.uniform(kb, (fan_out, 1), jnp.float32, -bound, bound)
        return w, b

    k1, k2, k3 = jax.random.split(key, 3)
    w1, b1 = linear(k1, input_size, 64)
    w2, b2 = linear(k2, 64, 32)
    w3, b3 = linear(k3, 32, 1)
    return w1, b1, w2, b2, w3, b3


def reference(x, params):
    w1, b1, w2, b2, w3, b3 = params
    h1 = jnp.maximum(x @ w1.T + b1.T, 0.0)
    h2 = jnp.maximum(h1 @ w2.T + b2.T, 0.0)
    return jax.nn.sigmoid(h2 @ w3.T + b3.T)


if __name__ == "__main__":
    key = jax.random.PRNGKey(0)
    kx, kp = jax.random.split(key)

    input_size = 16
    params = init_params(kp, input_size)

    # Small batch: single (padded-to-128) tile path.
    x_small = jax.random.normal(kx, (8, input_size), jnp.float32)
    out_small = jax.block_until_ready(simple_nn_forward(x_small, params))
    ref_small = reference(x_small, params)
    assert out_small.shape == (8, 1)
    assert jnp.allclose(out_small, ref_small, atol=2e-2), "small-batch mismatch"

    # Larger batch: exercises the batch grid, padding, and weight residency.
    x_big = jax.random.normal(kx, (600, input_size), jnp.float32)
    out_big = jax.block_until_ready(simple_nn_forward(x_big, params))
    ref_big = reference(x_big, params)
    assert out_big.shape == (600, 1)
    assert jnp.allclose(out_big, ref_big, atol=2e-2), "big-batch mismatch"

    print("KERNEL_OK")
</pallas_src>

<mosaic_0001>
module attributes {stable_mosaic.version = 11 : i64} {
  func.func @mlp_kernel(%arg0: i32, %arg1: memref<16x128xbf16, #tpu.memory_space<vmem>>, %arg2: memref<64x16xbf16, #tpu.memory_space<vmem>>, %arg3: memref<64x1xf32, #tpu.memory_space<vmem>>, %arg4: memref<32x64xbf16, #tpu.memory_space<vmem>>, %arg5: memref<32x1xf32, #tpu.memory_space<vmem>>, %arg6: memref<1x32xbf16, #tpu.memory_space<vmem>>, %arg7: memref<1x1xf32, #tpu.memory_space<smem>>, %arg8: memref<1x128xf32, #tpu.memory_space<vmem>>) attributes {dimension_semantics = [#tpu.dimension_semantics<parallel>], iteration_bounds = array<i64: 1>, scalar_prefetch = 0 : i64, scratch_operands = 0 : i64, tpu.core_type = #tpu.core_type<tc>, window_params = [{transform_indices = @transform_0, window_bounds = array<i64: 16, 128>}, {pipeline_mode = #tpu.pipeline_mode<synchronous>, transform_indices = @transform_1, window_bounds = array<i64: 64, 16>}, {pipeline_mode = #tpu.pipeline_mode<synchronous>, transform_indices = @transform_2, window_bounds = array<i64: 64, 1>}, {pipeline_mode = #tpu.pipeline_mode<synchronous>, transform_indices = @transform_3, window_bounds = array<i64: 32, 64>}, {pipeline_mode = #tpu.pipeline_mode<synchronous>, transform_indices = @transform_4, window_bounds = array<i64: 32, 1>}, {pipeline_mode = #tpu.pipeline_mode<synchronous>, transform_indices = @transform_5, window_bounds = array<i64: 1, 32>}, {transform_indices = @transform_6, window_bounds = array<i64: 1, 1>}, {transform_indices = @transform_7, window_bounds = array<i64: 1, 128>}]} {
    %c0 = arith.constant 0 : index
    %c0_0 = arith.constant 0 : index
    %0 = vector.load %arg1[%c0, %c0_0] : memref<16x128xbf16, #tpu.memory_space<vmem>>, vector<16x128xbf16>
    %c0_1 = arith.constant 0 : index
    %c0_2 = arith.constant 0 : index
    %1 = vector.load %arg2[%c0_1, %c0_2] : memref<64x16xbf16, #tpu.memory_space<vmem>>, vector<64x16xbf16>
    %cst = arith.constant dense<0.000000e+00> : vector<64x128xf32>
    %2 = tpu.matmul %1, %0, %cst {dimension_numbers = #tpu.dot_dimension_numbers<[1], [0], [0], [1], [0, 0, 1, 1], [], []>} : vector<64x16xbf16>, vector<16x128xbf16>, vector<64x128xf32> -> vector<64x128xf32>
    %c0_3 = arith.constant 0 : index
    %c0_4 = arith.constant 0 : index
    %3 = vector.load %arg3[%c0_3, %c0_4] : memref<64x1xf32, #tpu.memory_space<vmem>>, vector<64x1xf32>
    %4 = vector.broadcast %3 : vector<64x1xf32> to vector<64x128xf32>
    %5 = arith.addf %2, %4 : vector<64x128xf32>
    %cst_5 = arith.constant 0.000000e+00 : f32
    %6 = vector.broadcast %cst_5 : f32 to vector<64x128xf32>
    %7 = arith.maximumf %5, %6 : vector<64x128xf32>
    %c0_6 = arith.constant 0 : index
    %c0_7 = arith.constant 0 : index
    %8 = vector.load %arg4[%c0_6, %c0_7] : memref<32x64xbf16, #tpu.memory_space<vmem>>, vector<32x64xbf16>
    %9 = arith.truncf %7 : vector<64x128xf32> to vector<64x128xbf16>
    %cst_8 = arith.constant dense<0.000000e+00> : vector<32x128xf32>
    %10 = tpu.matmul %8, %9, %cst_8 {dimension_numbers = #tpu.dot_dimension_numbers<[1], [0], [0], [1], [0, 0, 1, 1], [], []>} : vector<32x64xbf16>, vector<64x128xbf16>, vector<32x128xf32> -> vector<32x128xf32>
    %c0_9 = arith.constant 0 : index
    %c0_10 = arith.constant 0 : index
    %11 = vector.load %arg5[%c0_9, %c0_10] : memref<32x1xf32, #tpu.memory_space<vmem>>, vector<32x1xf32>
    %12 = vector.broadcast %11 : vector<32x1xf32> to vector<32x128xf32>
    %13 = arith.addf %10, %12 : vector<32x128xf32>
    %cst_11 = arith.constant 0.000000e+00 : f32
    %14 = vector.broadcast %cst_11 : f32 to vector<32x128xf32>
    %15 = arith.maximumf %13, %14 : vector<32x128xf32>
    %c0_12 = arith.constant 0 : index
    %c0_13 = arith.constant 0 : index
    %16 = vector.load %arg6[%c0_12, %c0_13] : memref<1x32xbf16, #tpu.memory_space<vmem>>, vector<1x32xbf16>
    %17 = arith.truncf %15 : vector<32x128xf32> to vector<32x128xbf16>
    %cst_14 = arith.constant dense<0.000000e+00> : vector<1x128xf32>
    %18 = tpu.matmul %16, %17, %cst_14 {dimension_numbers = #tpu.dot_dimension_numbers<[1], [0], [0], [1], [0, 0, 1, 1], [], []>} : vector<1x32xbf16>, vector<32x128xbf16>, vector<1x128xf32> -> vector<1x128xf32>
    %c0_15 = arith.constant 0 : index
    %c0_16 = arith.constant 0 : index
    %19 = memref.load %arg7[%c0_15, %c0_16] : memref<1x1xf32, #tpu.memory_space<smem>>
    %20 = vector.broadcast %19 : f32 to vector<1x128xf32>
    %21 = arith.addf %18, %20 : vector<1x128xf32>
    %cst_17 = arith.constant 0.000000e+00 : f32
    %22 = vector.broadcast %cst_17 : f32 to vector<1x128xf32>
    %23 = arith.subf %22, %21 : vector<1x128xf32>
    %24 = math.exp %23 : vector<1x128xf32>
    %cst_18 = arith.constant 1.000000e+00 : f32
    %25 = vector.broadcast %cst_18 : f32 to vector<1x128xf32>
    %26 = arith.addf %25, %24 : vector<1x128xf32>
    %27 = tpu.reciprocal %26 {approx = true} : vector<1x128xf32> -> vector<1x128xf32>
    %c0_19 = arith.constant 0 : index
    %c0_20 = arith.constant 0 : index
    %28 = vector.load %arg8[%c0_19, %c0_20] : memref<1x128xf32, #tpu.memory_space<vmem>>, vector<1x128xf32>
    tpu.vector_store %arg8[%c0_19, %c0_20], %27 {strides = array<i32>} : memref<1x128xf32, #tpu.memory_space<vmem>>, vector<1x128xf32>,
    return
  }
  func.func @transform_0(%arg0: i32) -> (i32, i32) {
    %c0_i32 = arith.constant 0 : i32
    %c0_i32_0 = arith.constant 0 : i32
    return %c0_i32, %arg0 : i32, i32
  }
  func.func @transform_1(%arg0: i32) -> (i32, i32) {
    %c0_i32 = arith.constant 0 : i32
    %c0_i32_0 = arith.constant 0 : i32
    %c0_i32_1 = arith.constant 0 : i32
    return %c0_i32, %c0_i32_0 : i32, i32
  }
  func.func @transform_2(%arg0: i32) -> (i32, i32) {
    %c0_i32 = arith.constant 0 : i32
    %c0_i32_0 = arith.constant 0 : i32
    %c0_i32_1 = arith.constant 0 : i32
    return %c0_i32, %c0_i32_0 : i32, i32
  }
  func.func @transform_3(%arg0: i32) -> (i32, i32) {
    %c0_i32 = arith.constant 0 : i32
    %c0_i32_0 = arith.constant 0 : i32
    %c0_i32_1 = arith.constant 0 : i32
    return %c0_i32, %c0_i32_0 : i32, i32
  }
  func.func @transform_4(%arg0: i32) -> (i32, i32) {
    %c0_i32 = arith.constant 0 : i32
    %c0_i32_0 = arith.constant 0 : i32
    %c0_i32_1 = arith.constant 0 : i32
    return %c0_i32, %c0_i32_0 : i32, i32
  }
  func.func @transform_5(%arg0: i32) -> (i32, i32) {
    %c0_i32 = arith.constant 0 : i32
    %c0_i32_0 = arith.constant 0 : i32
    %c0_i32_1 = arith.constant 0 : i32
    return %c0_i32, %c0_i32_0 : i32, i32
  }
  func.func @transform_6(%arg0: i32) -> (i32, i32) {
    %c0_i32 = arith.constant 0 : i32
    %c0_i32_0 = arith.constant 0 : i32
    %c0_i32_1 = arith.constant 0 : i32
    return %c0_i32, %c0_i32_0 : i32, i32
  }
  func.func @transform_7(%arg0: i32) -> (i32, i32) {
    %c0_i32 = arith.constant 0 : i32
    %c0_i32_0 = arith.constant 0 : i32
    return %c0_i32, %arg0 : i32, i32
  }
}

</mosaic_0001>

<llo_original>
// kernel: tpu_custom_call.1
$region0: #{tpu_custom_call.1}
  #allocation0 [shape = 'u32[]', space=smem, size = 0x4, offset = 0x4, fixed_abs, tag = 'smem constant byte address 0x4 - core index']
  #allocation1 [shape = 'u32[72,128]{1,0:T(1,128)}', space=vmem, size = 0x9000, scoped, tag = 'internal scratch']
  #allocation2 [shape = 'f32[1,1]{1,0:T(1,128)S(6)}', space=smem, size = 0x200, scoped, tag = 'scoped memory for tpu_custom_call.1']
  %s0 = inlined_call_operand.vmem [shape: bf16[16,128], index: 0, kind: input, shape index: {}]
  %s1 = inlined_call_operand.vmem [shape: bf16[64,16], index: 1, kind: input, shape index: {}]
  %s2 = inlined_call_operand.vmem [shape: f32[64,1], index: 2, kind: input, shape index: {}]
  %s3 = inlined_call_operand.vmem [shape: bf16[32,64], index: 3, kind: input, shape index: {}]
  %s4 = inlined_call_operand.vmem [shape: f32[32,1], index: 4, kind: input, shape index: {}]
  %s5 = inlined_call_operand.vmem [shape: bf16[1,32], index: 5, kind: input, shape index: {}]
  %s6 = inlined_call_operand.<no memory space> [shape: f32[1,1], index: 6, kind: input, shape index: {}]
  %s7 = inlined_call_operand.hbm [shape: f32[1,128], index: 7, kind: output, shape index: {}]
  %s8 = sld [smem:[#allocation0]]
  $region38: #{tpu_custom_call.1} parent=0
    _
  %s10 = ssub.s32 1, %s8
  %s11 = scalar_select 0, %s10, %s8
  %12 = sst [smem:[#allocation2]] %s6
  $region1: #{tpu_custom_call.1} parent=0
    #allocation3 [shape = 'u8[512]{0}', space=vmem, size = 0x400, scoped, tag = 'output window, operand 0, single buffered']
    #allocation4 [shape = 's32[1]{0}', space=sflag, size = 0x4, scoped, tag = 'scoped memory for tpu_custom_call.1']
    %13 = vsyncpa [#allocation4], 0
    // Predicated region
    $region2: #{tpu_custom_call.1} parent=1 // pred_check
      _
    $region3: #{tpu_custom_call.1} parent=1 // pred_check_branch
      %15 = sbr.rel (0) target = $region5
    $region4: #{tpu_custom_call.1} parent=1 // pred_region
      _
    $region5: #{tpu_custom_call.1} parent=1 // pred_fallthru
      _
    // Predicated region
    $region6: #{tpu_custom_call.1} parent=1 // pred_check
      _
    $region7: #{tpu_custom_call.1} parent=1 // pred_check_branch
      %17 = sbr.rel (0) target = $region9
    $region8: #{tpu_custom_call.1} parent=1 // pred_region
      _
    $region9: #{tpu_custom_call.1} parent=1 // pred_fallthru
      _
    // Predicated region
    $region10: #{tpu_custom_call.1} parent=1 // pred_check
      _
    $region11: #{tpu_custom_call.1} parent=1 // pred_check_branch
      %19 = sbr.rel (0) target = $region13
    $region12: #{tpu_custom_call.1} parent=1 // pred_region
      _
    $region13: #{tpu_custom_call.1} parent=1 // pred_fallthru
      _
    // Predicated region
    $region14: #{tpu_custom_call.1} parent=1 // pred_check
      _
    $region15: #{tpu_custom_call.1} parent=1 // pred_check_branch
      %21 = sbr.rel (0) target = $region17
    $region16: #{tpu_custom_call.1} parent=1 // pred_region
      _
    $region17: #{tpu_custom_call.1} parent=1 // pred_fallthru
      _
    // Predicated region
    $region18: #{tpu_custom_call.1} parent=1 // pred_check
      _
    $region19: #{tpu_custom_call.1} parent=1 // pred_check_branch
      %23 = sbr.rel (0) target = $region21
    $region20: #{tpu_custom_call.1} parent=1 // pred_region
      _
    $region21: #{tpu_custom_call.1} parent=1 // pred_fallthru
      _
    // Predicated region
    $region22: #{tpu_custom_call.1} parent=1 // pred_check
      _
    $region23: #{tpu_custom_call.1} parent=1 // pred_check_branch
      %25 = sbr.rel (0) target = $region25
    $region24: #{tpu_custom_call.1} parent=1 // pred_region
      _
    $region25: #{tpu_custom_call.1} parent=1 // pred_fallthru
      _
    // Predicated region
    $region26: #{tpu_custom_call.1} parent=1 // pred_check
      _
    $region27: #{tpu_custom_call.1} parent=1 // pred_check_branch
      %27 = sbr.rel (0) target = $region29
    $region28: #{tpu_custom_call.1} parent=1 // pred_region
      _
    $region29: #{tpu_custom_call.1} parent=1 // pred_fallthru
      _
    %v29 = vld [vmem:[%s0] sm:$0xf]
    %v30 = vld [vmem:[%s0 + $0x4] sm:$0xf]
    %v31 = vld [vmem:[%s1] sm:$0xf]
    %v32 = vld [vmem:[%s1 + $0x4] sm:$0xf]
    %v33 = vld [vmem:[%s1 + $0x8] sm:$0xf]
    %v34 = vld [vmem:[%s1 + $0xc] sm:$0xf]
    %v35 = vld [vmem:[%s1 + $0x10] sm:$0xf]
    %v36 = vld [vmem:[%s1 + $0x14] sm:$0xf]
    %v37 = vld [vmem:[%s1 + $0x18] sm:$0xf]
    %v38 = vld [vmem:[%s1 + $0x1c] sm:$0xf]
    %v39 = vld [vmem:[%s2] sm:$0xff]
    %v40 = vld [vmem:[%s2 + $0x8] sm:$0xff]
    %v41 = vld [vmem:[%s2 + $0x10] sm:$0xff]
    %v42 = vld [vmem:[%s2 + $0x18] sm:$0xff]
    %v43 = vld [vmem:[%s2 + $0x20] sm:$0xff]
    %v44 = vld [vmem:[%s2 + $0x28] sm:$0xff]
    %v45 = vld [vmem:[%s2 + $0x30] sm:$0xff]
    %v46 = vld [vmem:[%s2 + $0x38] sm:$0xff]
    %48 = vset.pattern.permute.xlu0 0
    %49 = vperm.xlu0 %48, %v39
    %v50 = vpop.permute.xlu0 %49
    %53 = vset.pattern.permute.xlu0 0
    %54 = vperm.xlu0 %53, %v40
    %v55 = vpop.permute.xlu0 %54
    %58 = vset.pattern.permute.xlu0 0
    %59 = vperm.xlu0 %58, %v41
    %v60 = vpop.permute.xlu0 %59
    %63 = vset.pattern.permute.xlu0 0
    %64 = vperm.xlu0 %63, %v42
    %v65 = vpop.permute.xlu0 %64
    %68 = vset.pattern.permute.xlu0 0
    %69 = vperm.xlu0 %68, %v43
    %v70 = vpop.permute.xlu0 %69
    %73 = vset.pattern.permute.xlu0 0
    %74 = vperm.xlu0 %73, %v44
    %v75 = vpop.permute.xlu0 %74
    %78 = vset.pattern.permute.xlu0 0
    %79 = vperm.xlu0 %78, %v45
    %v80 = vpop.permute.xlu0 %79
    %83 = vset.pattern.permute.xlu0 0
    %84 = vperm.xlu0 %83, %v46
    %v85 = vpop.permute.xlu0 %84
    %v95 = vunpack.c.l.b16 %v31
    %v96 = vunpack.c.l.b16 %v32
    %v97 = vunpack.c.l.b16 %v33
    %v98 = vunpack.c.l.b16 %v34
    %v99 = vunpack.c.l.b16 %v35
    %v100 = vunpack.c.l.b16 %v36
    %v101 = vunpack.c.l.b16 %v37
    %v102 = vunpack.c.l.b16 %v38
    %v103 = vpack.c.b16 %v96, %v95
    %v104 = vpack.c.b16 %v98, %v97
    %v105 = vpack.c.b16 %v100, %v99
    %v106 = vpack.c.b16 %v102, %v101
    %v109 = vunpack.c.l.b16 %v29
    %v110 = vunpack.c.l.b16 %v30
    %v111 = vpack.c.b16 %v110, %v109
    %vm113 = vcmask 130048
    %v115 = vsel %vm113, %v103, 0
    %v118 = vsel %vm113, %v104, 0
    %v121 = vsel %vm113, %v105, 0
    %v124 = vsel %vm113, %v106, 0
    %126 = vmatpush.bf16.msra.mxu0 0
    %127 = vmatpush.bf16.msra.mxu0 0
    %128 = vmatpush.bf16.msra.mxu0 0
    %129 = vmatpush.bf16.msra.mxu0 0
    %130 = vmatpush.bf16.msra.mxu0 0
    %131 = vmatpush.bf16.msra.mxu0 0
    %132 = vmatpush.bf16.msra.mxu0 0
    %133 = vmatpush.bf16.msra.mxu0 %v111
    %134 = vmatmul.bf16.gmra.mxu0 %v115
    %v135 = vpop.f32.mrf.mxu0
    %v136 = vadd.f32 %v50, %v135
    %v137 = vpop.f32.mrf.mxu0
    %v138 = vadd.f32 %v55, %v137
    %139 = vmatmul.bf16.gmra.mxu0 %v118
    %v140 = vpop.f32.mrf.mxu0
    %v141 = vadd.f32 %v60, %v140
    %v142 = vpop.f32.mrf.mxu0
    %v143 = vadd.f32 %v65, %v142
    %144 = vmatmul.bf16.gmra.mxu0 %v121
    %v145 = vpop.f32.mrf.mxu0
    %v146 = vadd.f32 %v70, %v145
    %v147 = vpop.f32.mrf.mxu0
    %v148 = vadd.f32 %v75, %v147
    %149 = vmatmul.bf16.gmra.mxu0 %v124
    %v150 = vpop.f32.mrf.mxu0
    %v151 = vadd.f32 %v80, %v150
    %v152 = vpop.f32.mrf.mxu0
    %v153 = vadd.f32 %v85, %v152
    %154 = vdwg.mxu0
    %v155 = vmax.f32 %v136, 0.0
    %v156 = vmax.f32 %v138, 0.0
    %v157 = vmax.f32 %v141, 0.0
    %v158 = vmax.f32 %v143, 0.0
    %v159 = vmax.f32 %v146, 0.0
    %v160 = vmax.f32 %v148, 0.0
    %v161 = vmax.f32 %v151, 0.0
    %v162 = vmax.f32 %v153, 0.0
    %v163 = vld [vmem:[%s3] sm:$0xf]
    %v164 = vld [vmem:[%s3 + $0x4] sm:$0xf]
    %v165 = vld [vmem:[%s3 + $0x8] sm:$0xf]
    %v166 = vld [vmem:[%s3 + $0xc] sm:$0xf]
    %v167 = vpack.c.bf16 %v156, %v155
    %v168 = vpack.c.bf16 %v158, %v157
    %v169 = vpack.c.bf16 %v160, %v159
    %v170 = vpack.c.bf16 %v162, %v161
    %v171 = vld [vmem:[%s4] sm:$0xff]
    %v172 = vld [vmem:[%s4 + $0x8] sm:$0xff]
    %v173 = vld [vmem:[%s4 + $0x10] sm:$0xff]
    %v174 = vld [vmem:[%s4 + $0x18] sm:$0xff]
    %176 = vset.pattern.permute.xlu0 0
    %177 = vperm.xlu0 %176, %v171
    %v178 = vpop.permute.xlu0 %177
    %181 = vset.pattern.permute.xlu0 0
    %182 = vperm.xlu0 %181, %v172
    %v183 = vpop.permute.xlu0 %182
    %186 = vset.pattern.permute.xlu0 0
    %187 = vperm.xlu0 %186, %v173
    %v188 = vpop.permute.xlu0 %187
    %191 = vset.pattern.permute.xlu0 0
    %192 = vperm.xlu0 %191, %v174
    %v193 = vpop.permute.xlu0 %192
    %v199 = vunpack.c.l.b16 %v163
    %v200 = vunpack.c.l.b16 %v164
    %v201 = vunpack.c.l.b16 %v165
    %v202 = vunpack.c.l.b16 %v166
    %v203 = vpack.c.b16 %v200, %v199
    %v204 = vpack.c.b16 %v202, %v201
    %vm205 = vcmask 523264
    %v207 = vsel %vm205, %v203, 0
    %v210 = vsel %vm205, %v204, 0
    %212 = vmatpush.bf16.msra.mxu0 0
    %213 = vmatpush.bf16.msra.mxu0 0
    %214 = vmatpush.bf16.msra.mxu0 0
    %215 = vmatpush.bf16.msra.mxu0 0
    %216 = vmatpush.bf16.msra.mxu0 %v170
    %217 = vmatpush.bf16.msra.mxu0 %v169
    %218 = vmatpush.bf16.msra.mxu0 %v168
    %219 = vmatpush.bf16.msra.mxu0 %v167
    %220 = vmatmul.bf16.gmra.mxu0 %v207
    %v221 = vpop.f32.mrf.mxu0
    %v222 = vadd.f32 %v178, %v221
    %v223 = vpop.f32.mrf.mxu0
    %v224 = vadd.f32 %v183, %v223
    %225 = vmatmul.bf16.gmra.mxu0 %v210
    %v226 = vpop.f32.mrf.mxu0
    %v227 = vadd.f32 %v188, %v226
    %v228 = vpop.f32.mrf.mxu0
    %v229 = vadd.f32 %v193, %v228
    %230 = vdwg.mxu0
    %v231 = vmax.f32 %v222, 0.0
    %v232 = vmax.f32 %v224, 0.0
    %v233 = vmax.f32 %v227, 0.0
    %v234 = vmax.f32 %v229, 0.0
    %v235 = vld [vmem:[%s5] sm:$0x1]
    %v236 = vpack.c.bf16 %v232, %v231
    %v237 = vpack.c.bf16 %v234, %v233
    %s238 = sld [smem:[#allocation2]]
    %v239 = vstv %s238
    %vm240 = vcmask 261120
    %v242 = vsel %vm240, %v235, 0
    %244 = vmatpush.bf16.msra.mxu0 0
    %245 = vmatpush.bf16.msra.mxu0 0
    %246 = vmatpush.bf16.msra.mxu0 0
    %247 = vmatpush.bf16.msra.mxu0 0
    %248 = vmatpush.bf16.msra.mxu0 0
    %249 = vmatpush.bf16.msra.mxu0 0
    %250 = vmatpush.bf16.msra.mxu0 %v237
    %251 = vmatpush.bf16.msra.mxu0 %v236
    %252 = vmatmul.bf16.gmra.mxu0 %v242
    %v253 = vpop.f32.mrf.mxu0
    %v254 = vadd.f32 %v239, %v253
    %v255 = vpop.f32.mrf.mxu0
    %256 = vdwg.mxu0
    %v257 = vsub.f32 0.0, %v254
    %v258 = vmul.f32 %v257, 1.442695
    %v259 = vpow.pop %v258
    %v260 = vadd.f32 %v259, 1.0
    %v261 = vrcp.pop %v260
    %262 = vst [vmem:[#allocation3] sm:$0x1] %v261
    // Predicated region
    $region30: #{tpu_custom_call.1} parent=1 // pred_check
      _
    $region31: #{tpu_custom_call.1} parent=1 // pred_check_branch
      %264 = sbr.rel (0) target = $region33
    $region32: #{tpu_custom_call.1} parent=1 // pred_region
      %266 = vsyncadd [#allocation4], 0
      %s268 = sshll.u32 [#allocation3], 4
      %s269 = int_to_ptr.vmem [resolvable:$true] %s268
      %s270 = sshll.u32 %s7, 4
      %s271 = int_to_ptr.hbm [resolvable:$true] %s270
      %273 = dma.vmem_to_hbm [thread:$0]  %s269, 16, %s271, [#allocation4]
    $region33: #{tpu_custom_call.1} parent=1 // pred_fallthru
      _
    // Predicated region
    $region34: #{tpu_custom_call.1} parent=1 // pred_check
      _
    $region35: #{tpu_custom_call.1} parent=1 // pred_check_branch
      %275 = sbr.rel (0) target = $region37
    $region36: #{tpu_custom_call.1} parent=1 // pred_region
      %277 = dma.done [#allocation4], 16
    $region37: #{tpu_custom_call.1} parent=1 // pred_fallthru
      _
    %278 = vsyncpa [#allocation4], 1

</llo_original>
